<compile_context>
chip_gen: v7x
topology: tpu7x:2x2x1
jax: 0.10.0
libtpu: 0.0.40
codegen_flags: <defaults>
</compile_context>

<pallas_src>
import functools
import math

import jax
import jax.numpy as jnp
from jax.experimental import pallas as pl
from jax.experimental.pallas import tpu as pltpu


def _add_pe_kernel(x_ref, pe_ref, o_ref):
    # x_ref / o_ref: (1, TS, D2) in x.dtype; pe_ref: (TS, D2) float32.
    # Add in float32 (matches torch adding an f32 registered buffer), cast on store.
    x = x_ref[...].astype(jnp.float32)
    o_ref[...] = (x + pe_ref[...]).astype(o_ref.dtype)


@functools.lru_cache(maxsize=None)
def _pe_table(max_len: int, d_model: int) -> jax.Array:
    """Float32 sinusoidal table, built once per (max_len, d_model).

    Mirrors the PyTorch buffer: pe[:, 0::2] = sin, pe[:, 1::2] = cos, built here
    by interleaving (stack + reshape) instead of two strided scatters.
    """
    if d_model % 2 != 0:
        raise ValueError("d_model must be even (same constraint as the torch module).")
    position = jnp.arange(max_len, dtype=jnp.float32)[:, None]
    div_term = jnp.exp(
        -math.log(10000.0)
        * jnp.arange(0, d_model, 2, dtype=jnp.float32) / d_model)
    angles = position * div_term                          # (max_len, d_model // 2)
    pe = jnp.stack([jnp.sin(angles), jnp.cos(angles)], axis=-1)
    return pe.reshape(max_len, d_model)                   # interleaved sin/cos


_TARGET_BLOCK_BYTES = 2 << 20  # ~2 MiB x-block -> ~12 MiB pipelined footprint.


def _choose_row_tile(s2: int, d2: int, itemsize: int, batch: int) -> int:
    """Row tile TS: sublane-dense multiple of 8/16, ~2 MiB blocks, no divisor search."""
    sub = 8 if itemsize >= 4 else 16                      # min sublane tile per dtype
    row_bytes = d2 * max(itemsize, 4)                     # PE rows are f32
    ts = max(1, _TARGET_BLOCK_BYTES // row_bytes)
    ts = max(sub, (ts // sub) * sub)
    if ts >= s2:
        ts = s2                                           # full extent (always legal)
        if batch == 1 and s2 > sub:
            # v7x has 2 TensorCores: make sure the grid has >= 2 parallel steps.
            half = (s2 + 1) // 2
            ts = max(sub, ((half + sub - 1) // sub) * sub)
            if ts >= s2:
                ts = s2
    return ts


def sinusoidal_positional_encoding(x: jax.Array, max_len: int = 512,
                                   batch_first: bool = True) -> jax.Array:
    """Adds sinusoidal positional encoding to x.

    x: (batch, seq_len, d_model) if batch_first else (seq_len, batch, d_model).
    NOTE: for input_output_aliases to actually reuse x's HBM buffer, donate x at
    the jit boundary, e.g. jax.jit(sinusoidal_positional_encoding,
    static_argnames=("max_len", "batch_first"), donate_argnums=(0,)).
    """
    if not batch_first:
        # TODO(synk): a dedicated (seq, batch, d) kernel would avoid these transposes.
        x = jnp.swapaxes(x, 0, 1)
    batch, seq_len, d_model = x.shape
    if seq_len > max_len:
        raise ValueError(f"seq_len={seq_len} exceeds max_len={max_len}")

    pe = _pe_table(max_len, d_model)[:seq_len]            # (seq_len, d_model) f32

    # Pick a lane-dense last dim D2 and fold the rest of (seq, d) into rows S2.
    flat = seq_len * d_model
    if d_model % 128 == 0:
        d2 = d_model
    elif flat % 128 == 0:
        d2 = 128
    else:
        # TODO(synk): pad flat to a multiple of 128 for large oddly-shaped inputs;
        # this lane-sparse fallback is correct but issues masked partial stores.
        d2 = d_model
    s2 = flat // d2

    itemsize = jnp.dtype(x.dtype).itemsize
    ts = _choose_row_tile(s2, d2, itemsize, batch)
    grid_s = pl.cdiv(s2, ts)

    x3 = x.reshape(batch, s2, d2)
    pe2 = pe.reshape(s2, d2)

    out3 = pl.pallas_call(
        _add_pe_kernel,
        out_shape=jax.ShapeDtypeStruct((batch, s2, d2), x.dtype),
        grid=(grid_s, batch),                             # batch innermost: PE tile
        in_specs=[                                        # stays VMEM-resident.
            pl.BlockSpec((1, ts, d2), lambda s, b: (b, s, 0)),   # x tile
            pl.BlockSpec((ts, d2), lambda s, b: (s, 0)),         # PE tile (f32)
        ],
        out_specs=pl.BlockSpec((1, ts, d2), lambda s, b: (b, s, 0)),
        compiler_params=pltpu.CompilerParams(
            dimension_semantics=("parallel", "parallel"),
        ),
        input_output_aliases={0: 0},
        cost_estimate=pl.CostEstimate(
            flops=batch * flat,
            transcendentals=0,
            bytes_accessed=2 * batch * flat * itemsize + flat * 4,
        ),
    )(x3, pe2)

    out = out3.reshape(batch, seq_len, d_model)
    if not batch_first:
        out = jnp.swapaxes(out, 0, 1)
    return out


def _reference(x: jax.Array, max_len: int = 512) -> jax.Array:
    """Plain-JAX reference that mirrors the PyTorch buffer + forward exactly."""
    _, seq_len, d_model = x.shape
    position = jnp.arange(max_len, dtype=jnp.float32)[:, None]
    div_term = jnp.exp(-math.log(10000.0)
                       * jnp.arange(0, d_model, 2, dtype=jnp.float32) / d_model)
    pe = jnp.zeros((max_len, d_model), dtype=jnp.float32)
    pe = pe.at[:, 0::2].set(jnp.sin(position * div_term))
    pe = pe.at[:, 1::2].set(jnp.cos(position * div_term))
    return (x.astype(jnp.float32) + pe[None, :seq_len, :]).astype(x.dtype)


if __name__ == "__main__":
    key = jax.random.PRNGKey(0)
    k1, k2 = jax.random.split(key)

    # Case 1: module-default layout, d_model < 128 (flat lane-dense path).
    # Donation at the jit boundary makes input_output_aliases={0: 0} effective.
    x = jax.random.normal(k1, (2, 8, 32), dtype=jnp.float32)
    ref = _reference(x, max_len=512)                      # compute ref before donation
    fwd = jax.jit(sinusoidal_positional_encoding,
                  static_argnames=("max_len", "batch_first"),
                  donate_argnums=(0,))
    out = jax.block_until_ready(fwd(x))
    assert out.shape == ref.shape and out.dtype == ref.dtype
    assert jnp.allclose(out, ref, atol=1e-5, rtol=1e-5)

    # Case 2: d_model % 128 == 0 path (lane dim = d_model), eager call.
    x2 = jax.random.normal(k2, (2, 16, 128), dtype=jnp.float32)
    out2 = jax.block_until_ready(sinusoidal_positional_encoding(x2))
    ref2 = _reference(x2, max_len=512)
    assert jnp.allclose(out2, ref2, atol=1e-5, rtol=1e-5)

    print("KERNEL_OK")
</pallas_src>

<mosaic_0001>
module attributes {stable_mosaic.version = 11 : i64} {
  func.func @_add_pe_kernel(%arg0: i32, %arg1: i32, %arg2: memref<1x2x128xf32, #tpu.memory_space<vmem>>, %arg3: memref<2x128xf32, #tpu.memory_space<vmem>>, %arg4: memref<1x2x128xf32, #tpu.memory_space<vmem>>) attributes {dimension_semantics = [#tpu.dimension_semantics<parallel>, #tpu.dimension_semantics<parallel>], iteration_bounds = array<i64: 1, 2>, scalar_prefetch = 0 : i64, scratch_operands = 0 : i64, tpu.core_type = #tpu.core_type<tc>, window_params = [{transform_indices = @transform_0, window_bounds = array<i64: 1, 2, 128>}, {transform_indices = @transform_1, window_bounds = array<i64: 2, 128>}, {transform_indices = @transform_2, window_bounds = array<i64: 1, 2, 128>}]} {
    %c0 = arith.constant 0 : index
    %c0_0 = arith.constant 0 : index
    %c0_1 = arith.constant 0 : index
    %0 = vector.load %arg2[%c0, %c0_0, %c0_1] : memref<1x2x128xf32, #tpu.memory_space<vmem>>, vector<1x2x128xf32>
    %c0_2 = arith.constant 0 : index
    %c0_3 = arith.constant 0 : index
    %1 = vector.load %arg3[%c0_2, %c0_3] : memref<2x128xf32, #tpu.memory_space<vmem>>, vector<2x128xf32>
    %2 = vector.shape_cast %1 : vector<2x128xf32> to vector<1x2x128xf32>
    %3 = arith.addf %0, %2 : vector<1x2x128xf32>
    %c0_4 = arith.constant 0 : index
    %c0_5 = arith.constant 0 : index
    %c0_6 = arith.constant 0 : index
    %4 = vector.load %arg4[%c0_4, %c0_5, %c0_6] : memref<1x2x128xf32, #tpu.memory_space<vmem>>, vector<1x2x128xf32>
    tpu.vector_store %arg4[%c0_4, %c0_5, %c0_6], %3 {strides = array<i32>} : memref<1x2x128xf32, #tpu.memory_space<vmem>>, vector<1x2x128xf32>,
    return
  }
  func.func @transform_0(%arg0: i32, %arg1: i32) -> (i32, i32, i32) {
    %c0_i32 = arith.constant 0 : i32
    %c0_i32_0 = arith.constant 0 : i32
    return %arg1, %arg0, %c0_i32 : i32, i32, i32
  }
  func.func @transform_1(%arg0: i32, %arg1: i32) -> (i32, i32) {
    %c0_i32 = arith.constant 0 : i32
    %c0_i32_0 = arith.constant 0 : i32
    return %arg0, %c0_i32 : i32, i32
  }
  func.func @transform_2(%arg0: i32, %arg1: i32) -> (i32, i32, i32) {
    %c0_i32 = arith.constant 0 : i32
    %c0_i32_0 = arith.constant 0 : i32
    return %arg1, %arg0, %c0_i32 : i32, i32, i32
  }
}

</mosaic_0001>

<llo_original>
// kernel: sinusoidal_positional_encoding.1
$region0: #{sinusoidal_positional_encoding.1}
  #allocation0 [shape = 'u32[]', space=smem, size = 0x4, offset = 0x4, fixed_abs, tag = 'smem constant byte address 0x4 - core index']
  #allocation1 [shape = 'u32[144,128]{1,0:T(1,128)}', space=vmem, size = 0x12000, scoped, tag = 'internal scratch']
  %s0 = inlined_call_operand.vmem [shape: f32[2,2,128], index: 0, kind: input, shape index: {}, may-alias: {0,2}]
  %s1 = inlined_call_operand.vmem [shape: f32[2,128], index: 1, kind: input, shape index: {}]
  %s2 = inlined_call_operand.vmem [shape: f32[2,2,128], index: 2, kind: output, shape index: {}, may-alias: {0,2}]
  %s3 = sld [smem:[#allocation0]]
  $region41: #{sinusoidal_positional_encoding.1} parent=0
    _
  %s5 = ssub.s32 1, %s3
  %s6 = scalar_select 0, %s5, %s3
  loop: start=0, step=1, limit=4
  $region2: #{sinusoidal_positional_encoding.1} parent=0 // loop_pre_header
    _
  $region3: #{sinusoidal_positional_encoding.1} parent=0 // loop_header
    %s8 = sphi 0, %s12
    %p9 = scmp.ge.s32.totalorder %s8, 4
    %s15 = sphi 0, %s27
    %s16 = sphi 0, %s23
    %s17 = sphi 0, %s15
    %s18 = sphi 0, %s16
    %s19 = sphi 0, %s17
    %s20 = sphi 0, %s18
    %s32 = sphi 0, %s34
    %s35 = sphi 0, %s32
    %s36 = sphi 0, %s35
    %s52 = sphi 0, %s36
    %s58 = sphi 0, %s60
    %s61 = sphi 0, %s58
    %s62 = sphi 0, %s61
    %s78 = sphi 0, %s62
    %s86 = sphi 0, %s88
    %s89 = sphi 0, %s86
    %s90 = sphi 0, %s89
    %s106 = sphi 0, %s90
  $region4: #{sinusoidal_positional_encoding.1} parent=0 // loop_header_branch
    %11 = sbr.rel (%p9) target = $region8
  $region5: #{sinusoidal_positional_encoding.1} parent=0 // loop_body
    %s13 = ssub.s32 %s8, 1
    %s14 = ssub.s32 %s8, 2
    %s21 = sadd.s32 1, %s16
    %p22 = scmp.ge.s32.totalorder %s21, 2
    %s23 = scalar_select %p22, 0, %s21
    %s24 = sadd.s32 1, %s15
    %s25 = scalar_select %p22, %s24, %s15
    %p26 = scmp.ge.s32.totalorder %s25, 1
    %s27 = scalar_select %p26, 0, %s25
    %s28 = ssub.s32 %s16, %s23
    %s29 = ssub.s32 %s15, %s27
    %s30 = sor.u32 %s28, %s29
    %p31 = scmp.eq.s32.totalorder %s30, 0
    %s33 = sadd.s32 %s32, 1
    %s34 = scalar_select %p31, %s32, %s33
    %p37 = pneg %p31
    %p38 = scmp.eq.s32.totalorder %s8, 1
    %p39 = por %p37, %p38
    %p40 = scmp.ne.s32.totalorder %s32, %s35
    %p41 = scmp.eq.s32.totalorder %s8, 0
    %p42 = por %p40, %p41
    %p43 = scmp.ne.s32.totalorder %s32, %s35
    %p44 = scmp.eq.s32.totalorder %s13, 1
    %p45 = por %p43, %p44
    %p46 = scmp.ne.s32.totalorder %s35, %s36
    %p47 = scmp.eq.s32.totalorder %s13, 0
    %p48 = por %p46, %p47
    %p49 = scmp.ne.s32.totalorder %s35, %s36
    %p50 = scmp.eq.s32.totalorder %s14, 1
    %p51 = por %p49, %p50
    %p53 = scmp.ne.s32.totalorder %s36, %s52
    %p54 = scmp.eq.s32.totalorder %s14, 0
    %p55 = por %p53, %p54
    %s56 = ssub.s32 %s15, %s27
    %p57 = scmp.eq.s32.totalorder %s56, 0
    %s59 = sadd.s32 %s58, 1
    %s60 = scalar_select %p57, %s58, %s59
    %p63 = pneg %p57
    %p64 = scmp.eq.s32.totalorder %s8, 1
    %p65 = por %p63, %p64
    %p66 = scmp.ne.s32.totalorder %s58, %s61
    %p67 = scmp.eq.s32.totalorder %s8, 0
    %p68 = por %p66, %p67
    %p69 = scmp.ne.s32.totalorder %s58, %s61
    %p70 = scmp.eq.s32.totalorder %s13, 1
    %p71 = por %p69, %p70
    %p72 = scmp.ne.s32.totalorder %s61, %s62
    %p73 = scmp.eq.s32.totalorder %s13, 0
    %p74 = por %p72, %p73
    %p75 = scmp.ne.s32.totalorder %s61, %s62
    %p76 = scmp.eq.s32.totalorder %s14, 1
    %p77 = por %p75, %p76
    %p79 = scmp.ne.s32.totalorder %s62, %s78
    %p80 = scmp.eq.s32.totalorder %s14, 0
    %p81 = por %p79, %p80
    %s82 = ssub.s32 %s16, %s23
    %s83 = ssub.s32 %s15, %s27
    %s84 = sor.u32 %s82, %s83
    %p85 = scmp.eq.s32.totalorder %s84, 0
    %s87 = sadd.s32 %s86, 1
    %s88 = scalar_select %p85, %s86, %s87
    %p91 = pneg %p85
    %p92 = scmp.eq.s32.totalorder %s8, 1
    %p93 = por %p91, %p92
    %p94 = scmp.ne.s32.totalorder %s86, %s89
    %p95 = scmp.eq.s32.totalorder %s8, 0
    %p96 = por %p94, %p95
    %p97 = scmp.ne.s32.totalorder %s86, %s89
    %p98 = scmp.eq.s32.totalorder %s13, 1
    %p99 = por %p97, %p98
    %p100 = scmp.ne.s32.totalorder %s89, %s90
    %p101 = scmp.eq.s32.totalorder %s13, 0
    %p102 = por %p100, %p101
    %p103 = scmp.ne.s32.totalorder %s89, %s90
    %p104 = scmp.eq.s32.totalorder %s14, 1
    %p105 = por %p103, %p104
    %p107 = scmp.ne.s32.totalorder %s90, %s106
    %p108 = scmp.eq.s32.totalorder %s14, 0
    %p109 = por %p107, %p108
    %p110 = scmp.le.s32.totalorder 1, %s8
    %p111 = scmp.lt.s32.totalorder %s8, 3
    %p112 = pnand %p110, %p111
    %p113 = pneg %p112
    // Predicated region
    $region9: #{sinusoidal_positional_encoding.1} parent=5 // pred_check
      _
    $region10: #{sinusoidal_positional_encoding.1} parent=5 // pred_check_branch
      %115 = sbr.rel (%p112) target = $region12
    $region11: #{sinusoidal_positional_encoding.1} parent=5 // pred_region
      %s116 = ssub.s32 %s8, 1
      // Predicated region
      $region13: #{sinusoidal_positional_encoding.1} parent=11 // pred_check
        %p117 = pneg %p74
      $region14: #{sinusoidal_positional_encoding.1} parent=11 // pred_check_branch
        %119 = sbr.rel (%p117) target = $region16
      $region15: #{sinusoidal_positional_encoding.1} parent=11 // pred_region
        %p120 = scmp.lt.s32.totalorder %s17, 0
        %s121 = scalar_select %p120, %s17, 0
        %s122 = smul.addr %s121, 2
        %s123 = scalar_lea.vmem %s1, %s122
      $region16: #{sinusoidal_positional_encoding.1} parent=11 // pred_fallthru
        _
    $region12: #{sinusoidal_positional_encoding.1} parent=5 // pred_fallthru
      _
    %p124 = scmp.lt.s32.totalorder %s8, 2
    // Predicated region
    $region17: #{sinusoidal_positional_encoding.1} parent=5 // pred_check
      %p125 = pneg %p124
    $region18: #{sinusoidal_positional_encoding.1} parent=5 // pred_check_branch
      %127 = sbr.rel (%p125) target = $region20
    $region19: #{sinusoidal_positional_encoding.1} parent=5 // pred_region
      // Predicated region
      $region21: #{sinusoidal_positional_encoding.1} parent=19 // pred_check
        %p128 = pneg %p42
      $region22: #{sinusoidal_positional_encoding.1} parent=19 // pred_check_branch
        %130 = sbr.rel (%p128) target = $region24
      $region23: #{sinusoidal_positional_encoding.1} parent=19 // pred_region
        %p131 = scmp.lt.s32.totalorder %s16, 1
        %s132 = scalar_select %p131, %s16, 1
        %p133 = scmp.lt.s32.totalorder %s15, 0
        %s134 = scalar_select %p133, %s15, 0
        %s135 = sadd.s32 %s134, %s132
        %s136 = smul.addr %s135, 2
        %s137 = scalar_lea.vmem %s0, %s136
      $region24: #{sinusoidal_positional_encoding.1} parent=19 // pred_fallthru
        _
    $region20: #{sinusoidal_positional_encoding.1} parent=5 // pred_fallthru
      _
    %p138 = scmp.le.s32.totalorder 1, %s8
    %p139 = scmp.lt.s32.totalorder %s8, 3
    %p140 = pnand %p138, %p139
    %p141 = pneg %p140
    // Predicated region
    $region25: #{sinusoidal_positional_encoding.1} parent=5 // pred_check
      _
    $region26: #{sinusoidal_positional_encoding.1} parent=5 // pred_check_branch
      %143 = sbr.rel (%p140) target = $region28
    $region27: #{sinusoidal_positional_encoding.1} parent=5 // pred_region
      %s144 = ssub.s32 %s8, 1
      %p145 = scmp.lt.s32.totalorder %s18, 1
      %s146 = scalar_select %p145, %s18, 1
      %p147 = scmp.lt.s32.totalorder %s17, 0
      %s148 = scalar_select %p147, %s17, 0
      %s149 = sadd.s32 %s148, %s146
      %s150 = smul.addr %s149, 2
      %s151 = scalar_lea.vmem %s0, %s150
      %p152 = pneg %p48
      %p153 = pneg %p45
      %p154 = scmp.lt.s32.totalorder %s17, 0
      %s155 = scalar_select %p154, %s17, 0
      %s156 = smul.addr %s155, 2
      %s157 = scalar_lea.vmem %s1, %s156
      %p158 = pneg %p74
      %p159 = pneg %p71
      %p160 = pneg %p102
      %p161 = pneg %p99
      %p162 = scmp.lt.s32.totalorder %s18, 1
      %s163 = scalar_select %p162, %s18, 1
      %p164 = scmp.lt.s32.totalorder %s17, 0
      %s165 = scalar_select %p164, %s17, 0
      %s166 = sadd.s32 %s165, %s163
      %s167 = smul.addr %s166, 2
      %s168 = scalar_lea.vmem %s2, %s167
      %p169 = scmp.lt.s32.totalorder %s18, 1
      %s170 = scalar_select %p169, %s18, 1
      %p171 = scmp.lt.s32.totalorder %s17, 0
      %s172 = scalar_select %p171, %s17, 0
      %s173 = sadd.s32 %s172, %s170
      %s174 = smul.addr %s173, 2
      %s175 = scalar_lea.vmem %s0, %s174
      %p176 = scmp.lt.s32.totalorder %s17, 0
      %s177 = scalar_select %p176, %s17, 0
      %s178 = smul.addr %s177, 2
      %s179 = scalar_lea.vmem %s1, %s178
      %p180 = scmp.lt.s32.totalorder %s18, 1
      %s181 = scalar_select %p180, %s18, 1
      %p182 = scmp.lt.s32.totalorder %s17, 0
      %s183 = scalar_select %p182, %s17, 0
      %s184 = sadd.s32 %s183, %s181
      %s185 = smul.addr %s184, 2
      %s186 = scalar_lea.vmem %s2, %s185
      %v187 = vld [vmem:[%s175] sm:$0x3]
      %v188 = vld [vmem:[%s179] sm:$0x3]
      %v189 = vadd.f32 %v187, %v188
      %190 = vst [vmem:[%s186] sm:$0x3] %v189
      %p191 = scmp.lt.s32.totalorder %s18, 1
      %s192 = scalar_select %p191, %s18, 1
      %p193 = scmp.lt.s32.totalorder %s17, 0
      %s194 = scalar_select %p193, %s17, 0
      %s195 = sadd.s32 %s194, %s192
      %s196 = smul.addr %s195, 2
      %s197 = scalar_lea.vmem %s2, %s196
      // Predicated region
      $region29: #{sinusoidal_positional_encoding.1} parent=27 // pred_check
        %p198 = pneg %p99
      $region30: #{sinusoidal_positional_encoding.1} parent=27 // pred_check_branch
        %200 = sbr.rel (%p198) target = $region32
      $region31: #{sinusoidal_positional_encoding.1} parent=27 // pred_region
        _
      $region32: #{sinusoidal_positional_encoding.1} parent=27 // pred_fallthru
        _
    $region28: #{sinusoidal_positional_encoding.1} parent=5 // pred_fallthru
      _
    %p201 = scmp.le.s32.totalorder 2, %s8
    // Predicated region
    $region33: #{sinusoidal_positional_encoding.1} parent=5 // pred_check
      %p202 = pneg %p201
    $region34: #{sinusoidal_positional_encoding.1} parent=5 // pred_check_branch
      %204 = sbr.rel (%p202) target = $region36
    $region35: #{sinusoidal_positional_encoding.1} parent=5 // pred_region
      %s205 = ssub.s32 %s8, 2
      // Predicated region
      $region37: #{sinusoidal_positional_encoding.1} parent=35 // pred_check
        %p206 = pneg %p105
      $region38: #{sinusoidal_positional_encoding.1} parent=35 // pred_check_branch
        %208 = sbr.rel (%p206) target = $region40
      $region39: #{sinusoidal_positional_encoding.1} parent=35 // pred_region
        %p209 = scmp.lt.s32.totalorder %s20, 1
        %s210 = scalar_select %p209, %s20, 1
        %p211 = scmp.lt.s32.totalorder %s19, 0
        %s212 = scalar_select %p211, %s19, 0
        %s213 = sadd.s32 %s212, %s210
        %s214 = smul.addr %s213, 2
        %s215 = scalar_lea.vmem %s2, %s214
      $region40: #{sinusoidal_positional_encoding.1} parent=35 // pred_fallthru
        _
    $region36: #{sinusoidal_positional_encoding.1} parent=5 // pred_fallthru
      _
  $region6: #{sinusoidal_positional_encoding.1} parent=0 // loop_footer
    %s12 = sadd.s32 1, %s8
  $region7: #{sinusoidal_positional_encoding.1} parent=0 // loop_footer_branch
    %7 = sbr.rel target = $region3
  $region8: #{sinusoidal_positional_encoding.1} parent=0 // loop_exit
    _

</llo_original>
